<compile_context>
chip_gen: v7x
topology: tpu7x:2x2x1
jax: 0.10.0
libtpu: 0.0.40
codegen_flags: <defaults>
</compile_context>

<pallas_src>
import jax
import jax.numpy as jnp
import numpy as np
from jax import lax
from jax.experimental import pallas as pl
from jax.experimental.pallas import tpu as pltpu

IMAGE_WEIGHT = 0.0736196319
EXAM_WEIGHTS = (0.0736196319, 0.09202453988, 0.1042944785, 0.1042944785,
                0.1877300613, 0.06257668712, 0.06257668712, 0.2346625767,
                0.0782208589)
W_SUM = float(sum(EXAM_WEIGHTS))
EXAM_WEIGHTS_NP = np.array(EXAM_WEIGHTS, dtype=np.float32)


def _bce_with_logits(x, y):
    # Numerically stable BCEWithLogits (matches torch.nn.BCEWithLogitsLoss):
    #   max(x, 0) - x*y + log1p(exp(-|x|))
    return jnp.maximum(x, 0.0) - x * y + jnp.log1p(jnp.exp(-jnp.abs(x)))


def _exam_weight_tile(shape):
    # Static 9-element weight row built from iota + splat constants + selects
    # (no dense vector constant, no extra DMA'd input).
    col = lax.broadcasted_iota(jnp.int32, shape, 1)
    w = jnp.full(shape, EXAM_WEIGHTS[0], jnp.float32)
    for idx in range(1, 9):
        w = jnp.where(col == idx, jnp.float32(EXAM_WEIGHTS[idx]), w)
    return w


def _rsna_split_loss_kernel(img_pred_ref, label_img_ref, img_w_ref,
                            seq_len_ref, exam_pred_ref, exam_label_ref,
                            out_ref, acc_w_ref, acc_bce_ref):
    l = pl.program_id(1)
    n_l = pl.num_programs(1)
    TB, TL = img_pred_ref.shape

    @pl.when(l == 0)
    def _init():
        acc_w_ref[...] = jnp.zeros_like(acc_w_ref)
        acc_bce_ref[...] = jnp.zeros_like(acc_bce_ref)

    seq_len = seq_len_ref[...]                                    # [TB, 1] i32
    pos = l * TL + lax.broadcasted_iota(jnp.int32, (TB, TL), 1)   # global col
    valid = pos < seq_len                                         # [TB, TL]
    # jnp.where (not multiply) so OOB-padded tail garbage never propagates.

    img_w = img_w_ref[...] + IMAGE_WEIGHT                         # [TB, TL]
    bce = _bce_with_logits(img_pred_ref[...],
                           label_img_ref[...].astype(jnp.float32))

    masked_w = jnp.where(valid, img_w, 0.0)
    masked_bce = jnp.where(valid, bce, 0.0)

    # Lane-wide accumulation: fold (TB, TL) into (TB, 128) with lane-aligned
    # VPU adds only; the single (TB,128)->(TB,1) cross-lane XLU reduce happens
    # once per B block in _finalize.
    if TL % 128 == 0:
        new_w = acc_w_ref[...]
        new_bce = acc_bce_ref[...]
        for c in range(0, TL, 128):
            new_w = new_w + masked_w[:, c:c + 128]
            new_bce = new_bce + masked_bce[:, c:c + 128]
        acc_w_ref[...] = new_w
        acc_bce_ref[...] = new_bce
    else:
        # Only happens when TL == L (single L tile, nL == 1): one cross-lane
        # reduce for the whole row is fine here.  Stash into lane 0.
        col0 = lax.broadcasted_iota(jnp.int32, acc_w_ref.shape, 1) == 0
        acc_w_ref[...] += jnp.where(
            col0, jnp.sum(masked_w, axis=1, keepdims=True), 0.0)
        acc_bce_ref[...] += jnp.where(
            col0, jnp.sum(masked_bce, axis=1, keepdims=True), 0.0)

    @pl.when(l == n_l - 1)
    def _finalize():
        # ---- exam branch (tiny [TB, 9] work) --------------------------------
        w = _exam_weight_tile(exam_pred_ref.shape)
        exam_bce = _bce_with_logits(exam_pred_ref[...],
                                    exam_label_ref[...].astype(jnp.float32))
        exam_loss = jnp.sum(exam_bce * w)

        # ---- image branch finalize ------------------------------------------
        sum_w = jnp.sum(acc_w_ref[...], axis=1, keepdims=True)      # [TB, 1]
        sum_bce = jnp.sum(acc_bce_ref[...], axis=1, keepdims=True)  # [TB, 1]
        seq_len_f = seq_len.astype(jnp.float32)                     # [TB, 1]
        mean_w = sum_w / jnp.maximum(seq_len_f, 1.0)                # guard len==0
        image_exam_weight = IMAGE_WEIGHT * mean_w                   # [TB, 1]
        image_loss = jnp.sum(image_exam_weight * sum_bce)
        # TB always divides B exactly (see _choose_tiles), so summing
        # W_SUM * TB over B blocks reproduces weight.sum() * B.
        total_w = W_SUM * TB + jnp.sum(image_exam_weight * seq_len_f)

        row = lax.broadcasted_iota(jnp.int32, out_ref.shape, 0)
        col = lax.broadcasted_iota(jnp.int32, out_ref.shape, 1)
        loss_num = exam_loss + image_loss
        out_ref[...] = jnp.where(
            (row == 0) & (col == 0), loss_num,
            jnp.where((row == 0) & (col == 1), total_w, 0.0))


def _choose_tiles(B, L, max_block_elems):
    """Pick (TB, nB, TL, nL).  TB always divides B (or equals it); TL is the
    full L when the block fits the per-input budget, else a multiple of 128."""
    # ---- B axis: multiple-of-8 divisor of B, capped at 128 rows, chosen so
    # nB >= 2 when B >= 16 (keeps both v7x TensorCores busy on the "parallel"
    # grid axis).  Small / ragged B uses a single full-B block.
    if B % 8 != 0:
        TB = B
    else:
        target = max(8, min(128, ((B // 2) // 8) * 8))
        TB = 8
        for d in range(8, target + 1, 8):
            if B % d == 0:
                TB = d
    nB = B // TB

    # ---- L axis: lane-dense.  Full-L block (nL == 1) when it fits the
    # ~2 MiB/input budget; otherwise the largest multiple of 128 under budget.
    if TB * L <= max_block_elems:
        TL = L
    else:
        TL = max(128, (min(L, max_block_elems // TB) // 128) * 128)
    nL = pl.cdiv(L, TL)
    return TB, nB, TL, nL


def rsna_split_loss(image_pred, exam_pred, label, image_weight, seq_len,
                    *, binary_label=True, max_block_elems=512 * 1024):
    """image_pred: [B, L, 1], exam_pred: [B, 9], label: [B, L, 10],
    image_weight: [B, L], seq_len: [B] int. Returns scalar f32 loss.

    binary_label=True streams the (0/1) image label as bf16 (exact);
    set False if soft labels are possible."""
    B, L, _ = image_pred.shape

    img_pred0 = image_pred[:, :, 0].astype(jnp.float32)           # [B, L]
    # Label preprocessing (channel-0 slice + channel-1:10 max + cast) is a
    # single elementwise/reduce pass over [B, L, 10]; XLA fuses it into one
    # HBM read of the label slab.
    labelf = label.astype(jnp.float32)
    label_img = labelf[:, :, 0]                                   # [B, L]
    exam_label = jnp.max(labelf[:, :, 1:], axis=1)                # [B, 9]
    image_weight = image_weight.astype(jnp.float32)               # [B, L]
    exam_pred = exam_pred.astype(jnp.float32)                     # [B, 9]
    seq_len_2d = seq_len.astype(jnp.int32).reshape(B, 1)          # [B, 1]

    TB, nB, TL, nL = _choose_tiles(B, L, max_block_elems)

    # Binary image labels are exact in bf16 -> ~20% fewer streamed HBM bytes.
    # bf16 tiles need 16-row alignment unless the block spans the full B dim.
    if binary_label and (TB % 16 == 0 or TB == B):
        label_img = label_img.astype(jnp.bfloat16)
    label_bytes = 2 if label_img.dtype == jnp.bfloat16 else 4

    grid_spec = pltpu.PrefetchScalarGridSpec(
        num_scalar_prefetch=0,
        grid=(nB, nL),
        in_specs=[
            pl.BlockSpec((TB, TL), lambda i, l: (i, l)),   # image_pred
            pl.BlockSpec((TB, TL), lambda i, l: (i, l)),   # label (image ch)
            pl.BlockSpec((TB, TL), lambda i, l: (i, l)),   # image_weight
            pl.BlockSpec((TB, 1), lambda i, l: (i, 0)),    # seq_len
            pl.BlockSpec((TB, 9), lambda i, l: (i, 0)),    # exam_pred
            pl.BlockSpec((TB, 9), lambda i, l: (i, 0)),    # exam_label
        ],
        out_specs=pl.BlockSpec((8, 128), lambda i, l: (i, 0)),
        scratch_shapes=[pltpu.VMEM((TB, 128), jnp.float32),
                        pltpu.VMEM((TB, 128), jnp.float32)],
    )

    cost = pl.CostEstimate(
        flops=int(15 * B * L + 20 * B * 9),
        transcendentals=int(2 * B * L + 2 * B * 9),
        bytes_accessed=int(B * L * (4 + 4 + label_bytes)
                           + B * (4 + 9 * 8) + nB * 8 * 128 * 4),
    )

    partials = pl.pallas_call(
        _rsna_split_loss_kernel,
        out_shape=jax.ShapeDtypeStruct((nB * 8, 128), jnp.float32),
        grid_spec=grid_spec,
        compiler_params=pltpu.CompilerParams(
            dimension_semantics=("parallel", "arbitrary"),
            # Double-buffered working set stays <= ~12 MiB by construction;
            # 32 MiB scoped limit gives headroom on every generation
            # (v5e/v6e 128 MiB physical, v7x 64 MiB physical).
            vmem_limit_bytes=32 * 1024 * 1024),
        cost_estimate=cost,
    )(img_pred0, label_img, image_weight, seq_len_2d, exam_pred, exam_label)

    partials = partials.reshape(nB, 8, 128)
    loss_num = jnp.sum(partials[:, 0, 0])
    total_w = jnp.sum(partials[:, 0, 1])
    return loss_num / total_w


def _reference_numpy(image_pred, exam_pred, label, image_weight, seq_len):
    def bce(x, y):
        return np.maximum(x, 0.0) - x * y + np.log1p(np.exp(-np.abs(x)))

    image_pred = np.asarray(image_pred, np.float32)
    exam_pred = np.asarray(exam_pred, np.float32)
    label = np.asarray(label, np.float32)
    image_weight = np.asarray(image_weight, np.float32) + IMAGE_WEIGHT
    seq_len = np.asarray(seq_len)

    exam_label = label[:, :, 1:].max(axis=1)
    exam_loss = (bce(exam_pred, exam_label) * EXAM_WEIGHTS_NP).sum()
    total_weights = EXAM_WEIGHTS_NP.sum() * exam_pred.shape[0]
    image_loss = 0.0
    for j in range(len(seq_len)):
        n = int(seq_len[j])
        iw = IMAGE_WEIGHT * image_weight[j, :n].mean()
        image_loss += (bce(image_pred[j, :n, 0], label[j, :n, 0]) * iw).sum()
        total_weights += iw * n
    return np.float32((exam_loss + image_loss) / total_weights)


def _run_case(key, B, L, seq_len, **kwargs):
    k1, k2, k3, k4 = jax.random.split(key, 4)
    image_pred = jax.random.normal(k1, (B, L, 1), dtype=jnp.float32)
    exam_pred = jax.random.normal(k2, (B, 9), dtype=jnp.float32)
    label = (jax.random.uniform(k3, (B, L, 10)) > 0.5).astype(jnp.float32)
    image_weight = jax.random.uniform(k4, (B, L), dtype=jnp.float32)
    seq_len = jnp.asarray(seq_len, dtype=jnp.int32)

    loss = rsna_split_loss(image_pred, exam_pred, label, image_weight,
                           seq_len, **kwargs)
    loss = jax.block_until_ready(loss)
    ref = _reference_numpy(np.asarray(image_pred), np.asarray(exam_pred),
                           np.asarray(label), np.asarray(image_weight),
                           np.asarray(seq_len))
    assert np.allclose(np.asarray(loss), ref, rtol=1e-5, atol=1e-5), (loss, ref)


if __name__ == "__main__":
    key = jax.random.PRNGKey(0)
    k_a, k_b, k_c = jax.random.split(key, 3)

    # Small case consistent with the module (B=2, L=8): single full-array
    # block, bf16 label path, lane-0 accumulation branch.
    _run_case(k_a, B=2, L=8, seq_len=[6, 8])

    # Tiled path: 2 B-blocks ("parallel") x 3 L-tiles ("arbitrary" reduction),
    # padded last L tile, f32 label, chunked lane-wide accumulation.  The
    # tiny block budget override just forces multi-tile execution for testing.
    rng = np.random.RandomState(0)
    _run_case(k_b, B=16, L=520,
              seq_len=rng.randint(1, 521, size=(16,)),
              max_block_elems=2048)

    # Default block selection: TB=16 (nB=2 for v7x megacore), full-L tile
    # (nL=1), bf16 label path.
    _run_case(k_c, B=32, L=300,
              seq_len=rng.randint(1, 301, size=(32,)))

    print("KERNEL_OK")
</pallas_src>

<mosaic_0001>
module attributes {stable_mosaic.version = 11 : i64} {
  func.func @_rsna_split_loss_kernel(%arg0: i32, %arg1: i32, %arg2: memref<2x8xf32, #tpu.memory_space<vmem>>, %arg3: memref<2x8xbf16, #tpu.memory_space<vmem>>, %arg4: memref<2x8xf32, #tpu.memory_space<vmem>>, %arg5: memref<2x1xi32, #tpu.memory_space<vmem>>, %arg6: memref<2x9xf32, #tpu.memory_space<vmem>>, %arg7: memref<2x9xf32, #tpu.memory_space<vmem>>, %arg8: memref<8x128xf32, #tpu.memory_space<vmem>>, %arg9: memref<2x128xf32, #tpu.memory_space<vmem>>, %arg10: memref<2x128xf32, #tpu.memory_space<vmem>>) attributes {dimension_semantics = [#tpu.dimension_semantics<parallel>, #tpu.dimension_semantics<arbitrary>], iteration_bounds = array<i64: 1, 1>, scalar_prefetch = 0 : i64, scratch_operands = 2 : i64, tpu.core_type = #tpu.core_type<tc>, window_params = [{transform_indices = @transform_0, window_bounds = array<i64: 2, 8>}, {transform_indices = @transform_1, window_bounds = array<i64: 2, 8>}, {transform_indices = @transform_2, window_bounds = array<i64: 2, 8>}, {transform_indices = @transform_3, window_bounds = array<i64: 2, 1>}, {transform_indices = @transform_4, window_bounds = array<i64: 2, 9>}, {transform_indices = @transform_5, window_bounds = array<i64: 2, 9>}, {transform_indices = @transform_6, window_bounds = array<i64: 8, 128>}]} {
    %c0_i32 = arith.constant 0 : i32
    %0 = arith.cmpi eq, %arg1, %c0_i32 : i32
    %1 = arith.extui %0 : i1 to i32
    %c0_i32_0 = arith.constant 0 : i32
    %2 = arith.cmpi ne, %1, %c0_i32_0 : i32
    scf.if %2 {
      %cst_27 = arith.constant 0.000000e+00 : f32
      %54 = vector.broadcast %cst_27 : f32 to vector<2x128xf32>
      %c0_28 = arith.constant 0 : index
      %c0_29 = arith.constant 0 : index
      %55 = vector.load %arg9[%c0_28, %c0_29] : memref<2x128xf32, #tpu.memory_space<vmem>>, vector<2x128xf32>
      tpu.vector_store %arg9[%c0_28, %c0_29], %54 {strides = array<i32>} : memref<2x128xf32, #tpu.memory_space<vmem>>, vector<2x128xf32>,
      %cst_30 = arith.constant 0.000000e+00 : f32
      %56 = vector.broadcast %cst_30 : f32 to vector<2x128xf32>
      %c0_31 = arith.constant 0 : index
      %c0_32 = arith.constant 0 : index
      %57 = vector.load %arg10[%c0_31, %c0_32] : memref<2x128xf32, #tpu.memory_space<vmem>>, vector<2x128xf32>
      tpu.vector_store %arg10[%c0_31, %c0_32], %56 {strides = array<i32>} : memref<2x128xf32, #tpu.memory_space<vmem>>, vector<2x128xf32>,
    } else {
    }
    %c0 = arith.constant 0 : index
    %c0_1 = arith.constant 0 : index
    %3 = vector.load %arg5[%c0, %c0_1] : memref<2x1xi32, #tpu.memory_space<vmem>>, vector<2x1xi32>
    %c8_i32 = arith.constant 8 : i32
    %4 = arith.muli %arg1, %c8_i32 : i32
    %5 = tpu.iota {dimensions = array<i32: 1>} : vector<2x8xi32>
    %6 = vector.broadcast %4 : i32 to vector<2x8xi32>
    %7 = arith.addi %6, %5 : vector<2x8xi32>
    %8 = vector.broadcast %3 : vector<2x1xi32> to vector<2x8xi32>
    %9 = arith.cmpi slt, %7, %8 : vector<2x8xi32>
    %c0_2 = arith.constant 0 : index
    %c0_3 = arith.constant 0 : index
    %10 = vector.load %arg4[%c0_2, %c0_3] : memref<2x8xf32, #tpu.memory_space<vmem>>, vector<2x8xf32>
    %cst = arith.constant 0.0736196339 : f32
    %11 = vector.broadcast %cst : f32 to vector<2x8xf32>
    %12 = arith.addf %10, %11 : vector<2x8xf32>
    %c0_4 = arith.constant 0 : index
    %c0_5 = arith.constant 0 : index
    %13 = vector.load %arg2[%c0_4, %c0_5] : memref<2x8xf32, #tpu.memory_space<vmem>>, vector<2x8xf32>
    %c0_6 = arith.constant 0 : index
    %c0_7 = arith.constant 0 : index
    %14 = vector.load %arg3[%c0_6, %c0_7] : memref<2x8xbf16, #tpu.memory_space<vmem>>, vector<2x8xbf16>
    %15 = arith.extf %14 : vector<2x8xbf16> to vector<2x8xf32>
    %cst_8 = arith.constant 0.000000e+00 : f32
    %16 = vector.broadcast %cst_8 : f32 to vector<2x8xf32>
    %17 = arith.maximumf %13, %16 : vector<2x8xf32>
    %18 = arith.mulf %13, %15 : vector<2x8xf32>
    %19 = arith.subf %17, %18 : vector<2x8xf32>
    %20 = math.absf %13 : vector<2x8xf32>
    %cst_9 = arith.constant 0.000000e+00 : f32
    %21 = vector.broadcast %cst_9 : f32 to vector<2x8xf32>
    %22 = arith.subf %21, %20 : vector<2x8xf32>
    %23 = math.exp %22 : vector<2x8xf32>
    %24 = math.log1p %23 : vector<2x8xf32>
    %25 = arith.addf %19, %24 : vector<2x8xf32>
    %cst_10 = arith.constant 0.000000e+00 : f32
    %26 = vector.broadcast %cst_10 : f32 to vector<2x8xf32>
    %27 = arith.select %9, %12, %26 : vector<2x8xi1>, vector<2x8xf32>
    %cst_11 = arith.constant 0.000000e+00 : f32
    %28 = vector.broadcast %cst_11 : f32 to vector<2x8xf32>
    %29 = arith.select %9, %25, %28 : vector<2x8xi1>, vector<2x8xf32>
    %30 = tpu.iota {dimensions = array<i32: 1>} : vector<2x128xi32>
    %c0_i32_12 = arith.constant 0 : i32
    %31 = vector.broadcast %c0_i32_12 : i32 to vector<2x128xi32>
    %32 = arith.cmpi eq, %30, %31 : vector<2x128xi32>
    %c0_13 = arith.constant 0 : index
    %c0_14 = arith.constant 0 : index
    %33 = vector.load %arg9[%c0_13, %c0_14] : memref<2x128xf32, #tpu.memory_space<vmem>>, vector<2x128xf32>
    %cst_15 = arith.constant dense<0.000000e+00> : vector<2xf32>
    %34 = vector.multi_reduction <add>, %27, %cst_15 [1] : vector<2x8xf32> to vector<2xf32>
    %35 = vector.shape_cast %34 : vector<2xf32> to vector<2x1xf32>
    %cst_16 = arith.constant 0.000000e+00 : f32
    %36 = vector.shape_cast %35 : vector<2x1xf32> to vector<2x1xf32>
    %37 = vector.broadcast %36 : vector<2x1xf32> to vector<2x128xf32>
    %38 = vector.broadcast %cst_16 : f32 to vector<2x128xf32>
    %39 = arith.select %32, %37, %38 : vector<2x128xi1>, vector<2x128xf32>
    %40 = arith.addf %33, %39 : vector<2x128xf32>
    %c0_17 = arith.constant 0 : index
    %c0_18 = arith.constant 0 : index
    %41 = vector.load %arg9[%c0_17, %c0_18] : memref<2x128xf32, #tpu.memory_space<vmem>>, vector<2x128xf32>
    tpu.vector_store %arg9[%c0_17, %c0_18], %40 {strides = array<i32>} : memref<2x128xf32, #tpu.memory_space<vmem>>, vector<2x128xf32>,
    %c0_19 = arith.constant 0 : index
    %c0_20 = arith.constant 0 : index
    %42 = vector.load %arg10[%c0_19, %c0_20] : memref<2x128xf32, #tpu.memory_space<vmem>>, vector<2x128xf32>
    %cst_21 = arith.constant dense<0.000000e+00> : vector<2xf32>
    %43 = vector.multi_reduction <add>, %29, %cst_21 [1] : vector<2x8xf32> to vector<2xf32>
    %44 = vector.shape_cast %43 : vector<2xf32> to vector<2x1xf32>
    %cst_22 = arith.constant 0.000000e+00 : f32
    %45 = vector.shape_cast %44 : vector<2x1xf32> to vector<2x1xf32>
    %46 = vector.broadcast %45 : vector<2x1xf32> to vector<2x128xf32>
    %47 = vector.broadcast %cst_22 : f32 to vector<2x128xf32>
    %48 = arith.select %32, %46, %47 : vector<2x128xi1>, vector<2x128xf32>
    %49 = arith.addf %42, %48 : vector<2x128xf32>
    %c0_23 = arith.constant 0 : index
    %c0_24 = arith.constant 0 : index
    %50 = vector.load %arg10[%c0_23, %c0_24] : memref<2x128xf32, #tpu.memory_space<vmem>>, vector<2x128xf32>
    tpu.vector_store %arg10[%c0_23, %c0_24], %49 {strides = array<i32>} : memref<2x128xf32, #tpu.memory_space<vmem>>, vector<2x128xf32>,
    %c0_i32_25 = arith.constant 0 : i32
    %51 = arith.cmpi eq, %arg1, %c0_i32_25 : i32
    %52 = arith.extui %51 : i1 to i32
    %c0_i32_26 = arith.constant 0 : i32
    %53 = arith.cmpi ne, %52, %c0_i32_26 : i32
    scf.if %53 {
      %54 = tpu.iota {dimensions = array<i32: 1>} : vector<2x9xi32>
      %cst_27 = arith.constant 0.0736196339 : f32
      %55 = vector.broadcast %cst_27 : f32 to vector<2x9xf32>
      %c1_i32 = arith.constant 1 : i32
      %56 = vector.broadcast %c1_i32 : i32 to vector<2x9xi32>
      %57 = arith.cmpi eq, %54, %56 : vector<2x9xi32>
      %cst_28 = arith.constant 0.0920245423 : f32
      %58 = vector.broadcast %cst_28 : f32 to vector<2x9xf32>
      %59 = arith.select %57, %58, %55 : vector<2x9xi1>, vector<2x9xf32>
      %c2_i32 = arith.constant 2 : i32
      %60 = vector.broadcast %c2_i32 : i32 to vector<2x9xi32>
      %61 = arith.cmpi eq, %54, %60 : vector<2x9xi32>
      %cst_29 = arith.constant 0.104294479 : f32
      %62 = vector.broadcast %cst_29 : f32 to vector<2x9xf32>
      %63 = arith.select %61, %62, %59 : vector<2x9xi1>, vector<2x9xf32>
      %c3_i32 = arith.constant 3 : i32
      %64 = vector.broadcast %c3_i32 : i32 to vector<2x9xi32>
      %65 = arith.cmpi eq, %54, %64 : vector<2x9xi32>
      %cst_30 = arith.constant 0.104294479 : f32
      %66 = vector.broadcast %cst_30 : f32 to vector<2x9xf32>
      %67 = arith.select %65, %66, %63 : vector<2x9xi1>, vector<2x9xf32>
      %c4_i32 = arith.constant 4 : i32
      %68 = vector.broadcast %c4_i32 : i32 to vector<2x9xi32>
      %69 = arith.cmpi eq, %54, %68 : vector<2x9xi32>
      %cst_31 = arith.constant 0.187730059 : f32
      %70 = vector.broadcast %cst_31 : f32 to vector<2x9xf32>
      %71 = arith.select %69, %70, %67 : vector<2x9xi1>, vector<2x9xf32>
      %c5_i32 = arith.constant 5 : i32
      %72 = vector.broadcast %c5_i32 : i32 to vector<2x9xi32>
      %73 = arith.cmpi eq, %54, %72 : vector<2x9xi32>
      %cst_32 = arith.constant 0.0625766888 : f32
      %74 = vector.broadcast %cst_32 : f32 to vector<2x9xf32>
      %75 = arith.select %73, %74, %71 : vector<2x9xi1>, vector<2x9xf32>
      %c6_i32 = arith.constant 6 : i32
      %76 = vector.broadcast %c6_i32 : i32 to vector<2x9xi32>
      %77 = arith.cmpi eq, %54, %76 : vector<2x9xi32>
      %cst_33 = arith.constant 0.0625766888 : f32
      %78 = vector.broadcast %cst_33 : f32 to vector<2x9xf32>
      %79 = arith.select %77, %78, %75 : vector<2x9xi1>, vector<2x9xf32>
      %c7_i32 = arith.constant 7 : i32
      %80 = vector.broadcast %c7_i32 : i32 to vector<2x9xi32>
      %81 = arith.cmpi eq, %54, %80 : vector<2x9xi32>
      %cst_34 = arith.constant 0.234662578 : f32
      %82 = vector.broadcast %cst_34 : f32 to vector<2x9xf32>
      %83 = arith.select %81, %82, %79 : vector<2x9xi1>, vector<2x9xf32>
      %c8_i32_35 = arith.constant 8 : i32
      %84 = vector.broadcast %c8_i32_35 : i32 to vector<2x9xi32>
      %85 = arith.cmpi eq, %54, %84 : vector<2x9xi32>
      %cst_36 = arith.constant 0.0782208592 : f32
      %86 = vector.broadcast %cst_36 : f32 to vector<2x9xf32>
      %87 = arith.select %85, %86, %83 : vector<2x9xi1>, vector<2x9xf32>
      %c0_37 = arith.constant 0 : index
      %c0_38 = arith.constant 0 : index
      %88 = vector.load %arg6[%c0_37, %c0_38] : memref<2x9xf32, #tpu.memory_space<vmem>>, vector<2x9xf32>
      %c0_39 = arith.constant 0 : index
      %c0_40 = arith.constant 0 : index
      %89 = vector.load %arg7[%c0_39, %c0_40] : memref<2x9xf32, #tpu.memory_space<vmem>>, vector<2x9xf32>
      %cst_41 = arith.constant 0.000000e+00 : f32
      %90 = vector.broadcast %cst_41 : f32 to vector<2x9xf32>
      %91 = arith.maximumf %88, %90 : vector<2x9xf32>
      %92 = arith.mulf %88, %89 : vector<2x9xf32>
      %93 = arith.subf %91, %92 : vector<2x9xf32>
      %94 = math.absf %88 : vector<2x9xf32>
      %cst_42 = arith.constant 0.000000e+00 : f32
      %95 = vector.broadcast %cst_42 : f32 to vector<2x9xf32>
      %96 = arith.subf %95, %94 : vector<2x9xf32>
      %97 = math.exp %96 : vector<2x9xf32>
      %98 = math.log1p %97 : vector<2x9xf32>
      %99 = arith.addf %93, %98 : vector<2x9xf32>
      %100 = arith.mulf %99, %87 : vector<2x9xf32>
      %101 = vector.shape_cast %100 : vector<2x9xf32> to vector<1x2x9xf32>
      %cst_43 = arith.constant dense<0.000000e+00> : vector<1xf32>
      %102 = vector.multi_reduction <add>, %101, %cst_43 [1, 2] : vector<1x2x9xf32> to vector<1xf32>
      %103 = vector.shape_cast %102 : vector<1xf32> to vector<1x1x1xf32>
      %104 = vector.extract %103[0, 0, 0] : f32 from vector<1x1x1xf32>
      %c0_44 = arith.constant 0 : index
      %c0_45 = arith.constant 0 : index
      %105 = vector.load %arg9[%c0_44, %c0_45] : memref<2x128xf32, #tpu.memory_space<vmem>>, vector<2x128xf32>
      %cst_46 = arith.constant dense<0.000000e+00> : vector<2xf32>
      %106 = vector.multi_reduction <add>, %105, %cst_46 [1] : vector<2x128xf32> to vector<2xf32>
      %107 = vector.shape_cast %106 : vector<2xf32> to vector<2x1xf32>
      %c0_47 = arith.constant 0 : index
      %c0_48 = arith.constant 0 : index
      %108 = vector.load %arg10[%c0_47, %c0_48] : memref<2x128xf32, #tpu.memory_space<vmem>>, vector<2x128xf32>
      %cst_49 = arith.constant dense<0.000000e+00> : vector<2xf32>
      %109 = vector.multi_reduction <add>, %108, %cst_49 [1] : vector<2x128xf32> to vector<2xf32>
      %110 = vector.shape_cast %109 : vector<2xf32> to vector<2x1xf32>
      %111 = arith.sitofp %3 : vector<2x1xi32> to vector<2x1xf32>
      %cst_50 = arith.constant 1.000000e+00 : f32
      %112 = vector.broadcast %cst_50 : f32 to vector<2x1xf32>
      %113 = arith.maximumf %111, %112 : vector<2x1xf32>
      %114 = arith.divf %107, %113 : vector<2x1xf32>
      %cst_51 = arith.constant 0.0736196339 : f32
      %115 = vector.broadcast %cst_51 : f32 to vector<2x1xf32>
      %116 = arith.mulf %115, %114 : vector<2x1xf32>
      %117 = arith.mulf %116, %110 : vector<2x1xf32>
      %118 = vector.shape_cast %117 : vector<2x1xf32> to vector<1x2x1xf32>
      %cst_52 = arith.constant dense<0.000000e+00> : vector<1xf32>
      %119 = vector.multi_reduction <add>, %118, %cst_52 [1, 2] : vector<1x2x1xf32> to vector<1xf32>
      %120 = vector.shape_cast %119 : vector<1xf32> to vector<1x1x1xf32>
      %121 = vector.extract %120[0, 0, 0] : f32 from vector<1x1x1xf32>
      %122 = arith.mulf %116, %111 : vector<2x1xf32>
      %123 = vector.shape_cast %122 : vector<2x1xf32> to vector<1x2x1xf32>
      %cst_53 = arith.constant dense<0.000000e+00> : vector<1xf32>
      %124 = vector.multi_reduction <add>, %123, %cst_53 [1, 2] : vector<1x2x1xf32> to vector<1xf32>
      %125 = vector.shape_cast %124 : vector<1xf32> to vector<1x1x1xf32>
      %126 = vector.extract %125[0, 0, 0] : f32 from vector<1x1x1xf32>
      %cst_54 = arith.constant 2.000000e+00 : f32
      %127 = arith.addf %cst_54, %126 : f32
      %128 = tpu.iota {dimensions = array<i32: 0>} : vector<8x128xi32>
      %129 = tpu.iota {dimensions = array<i32: 1>} : vector<8x128xi32>
      %130 = arith.addf %104, %121 : f32
      %c0_i32_55 = arith.constant 0 : i32
      %131 = vector.broadcast %c0_i32_55 : i32 to vector<8x128xi32>
      %132 = arith.cmpi eq, %128, %131 : vector<8x128xi32>
      %c0_i32_56 = arith.constant 0 : i32
      %133 = vector.broadcast %c0_i32_56 : i32 to vector<8x128xi32>
      %134 = arith.cmpi eq, %129, %133 : vector<8x128xi32>
      %135 = arith.andi %132, %134 : vector<8x128xi1>
      %c0_i32_57 = arith.constant 0 : i32
      %136 = vector.broadcast %c0_i32_57 : i32 to vector<8x128xi32>
      %137 = arith.cmpi eq, %128, %136 : vector<8x128xi32>
      %c1_i32_58 = arith.constant 1 : i32
      %138 = vector.broadcast %c1_i32_58 : i32 to vector<8x128xi32>
      %139 = arith.cmpi eq, %129, %138 : vector<8x128xi32>
      %140 = arith.andi %137, %139 : vector<8x128xi1>
      %cst_59 = arith.constant 0.000000e+00 : f32
      %141 = vector.broadcast %127 : f32 to vector<8x128xf32>
      %142 = vector.broadcast %cst_59 : f32 to vector<8x128xf32>
      %143 = arith.select %140, %141, %142 : vector<8x128xi1>, vector<8x128xf32>
      %144 = vector.broadcast %130 : f32 to vector<8x128xf32>
      %145 = arith.select %135, %144, %143 : vector<8x128xi1>, vector<8x128xf32>
      %c0_60 = arith.constant 0 : index
      %c0_61 = arith.constant 0 : index
      %146 = vector.load %arg8[%c0_60, %c0_61] : memref<8x128xf32, #tpu.memory_space<vmem>>, vector<8x128xf32>
      tpu.vector_store %arg8[%c0_60, %c0_61], %145 {strides = array<i32>} : memref<8x128xf32, #tpu.memory_space<vmem>>, vector<8x128xf32>,
    } else {
    }
    return
  }
  func.func @transform_0(%arg0: i32, %arg1: i32) -> (i32, i32) {
    %c0_i32 = arith.constant 0 : i32
    return %arg0, %arg1 : i32, i32
  }
  func.func @transform_1(%arg0: i32, %arg1: i32) -> (i32, i32) {
    %c0_i32 = arith.constant 0 : i32
    return %arg0, %arg1 : i32, i32
  }
  func.func @transform_2(%arg0: i32, %arg1: i32) -> (i32, i32) {
    %c0_i32 = arith.constant 0 : i32
    return %arg0, %arg1 : i32, i32
  }
  func.func @transform_3(%arg0: i32, %arg1: i32) -> (i32, i32) {
    %c0_i32 = arith.constant 0 : i32
    %c0_i32_0 = arith.constant 0 : i32
    return %arg0, %c0_i32 : i32, i32
  }
  func.func @transform_4(%arg0: i32, %arg1: i32) -> (i32, i32) {
    %c0_i32 = arith.constant 0 : i32
    %c0_i32_0 = arith.constant 0 : i32
    return %arg0, %c0_i32 : i32, i32
  }
  func.func @transform_5(%arg0: i32, %arg1: i32) -> (i32, i32) {
    %c0_i32 = arith.constant 0 : i32
    %c0_i32_0 = arith.constant 0 : i32
    return %arg0, %c0_i32 : i32, i32
  }
  func.func @transform_6(%arg0: i32, %arg1: i32) -> (i32, i32) {
    %c0_i32 = arith.constant 0 : i32
    %c0_i32_0 = arith.constant 0 : i32
    return %arg0, %c0_i32 : i32, i32
  }
}

</mosaic_0001>

<llo_original>
// kernel: tpu_custom_call.1
$region0: #{tpu_custom_call.1}
  #allocation0 [shape = 'u32[]', space=smem, size = 0x4, offset = 0x4, fixed_abs, tag = 'smem constant byte address 0x4 - core index']
  #allocation1 [shape = 'u32[144,128]{1,0:T(1,128)}', space=vmem, size = 0x12000, scoped, tag = 'internal scratch']
  #allocation2 [shape = 'f32[2,128]{1,0:T(2,128)}', space=vmem, size = 0x400, scoped, tag = 'scratch operand']
  #allocation3 [shape = 'f32[2,128]{1,0:T(2,128)}', space=vmem, size = 0x400, scoped, tag = 'scratch operand']
  %s0 = inlined_call_operand.vmem [shape: f32[2,8], index: 0, kind: input, shape index: {}]
  %s1 = inlined_call_operand.vmem [shape: bf16[2,8], index: 1, kind: input, shape index: {}]
  %s2 = inlined_call_operand.vmem [shape: f32[2,8], index: 2, kind: input, shape index: {}]
  %s3 = inlined_call_operand.vmem [shape: s32[2,1], index: 3, kind: input, shape index: {}]
  %s4 = inlined_call_operand.vmem [shape: f32[2,9], index: 4, kind: input, shape index: {}]
  %s5 = inlined_call_operand.vmem [shape: f32[2,9], index: 5, kind: input, shape index: {}]
  %s6 = inlined_call_operand.hbm [shape: f32[8,128], index: 6, kind: output, shape index: {}]
  %s7 = sld [smem:[#allocation0]]
  $region42: #{tpu_custom_call.1} parent=0
    _
  %s9 = ssub.s32 1, %s7
  %s10 = scalar_select 0, %s9, %s7
  $region1: #{tpu_custom_call.1} parent=0
    #allocation4 [shape = 'u8[4096]{0}', space=vmem, size = 0x1000, scoped, tag = 'output window, operand 0, single buffered']
    #allocation5 [shape = 's32[1]{0}', space=sflag, size = 0x4, scoped, tag = 'scoped memory for tpu_custom_call.1']
    %11 = vsyncpa [#allocation5], 0
    // Predicated region
    $region2: #{tpu_custom_call.1} parent=1 // pred_check
      _
    $region3: #{tpu_custom_call.1} parent=1 // pred_check_branch
      %13 = sbr.rel (0) target = $region5
    $region4: #{tpu_custom_call.1} parent=1 // pred_region
      _
    $region5: #{tpu_custom_call.1} parent=1 // pred_fallthru
      _
    // Predicated region
    $region6: #{tpu_custom_call.1} parent=1 // pred_check
      _
    $region7: #{tpu_custom_call.1} parent=1 // pred_check_branch
      %15 = sbr.rel (0) target = $region9
    $region8: #{tpu_custom_call.1} parent=1 // pred_region
      _
    $region9: #{tpu_custom_call.1} parent=1 // pred_fallthru
      _
    // Predicated region
    $region10: #{tpu_custom_call.1} parent=1 // pred_check
      _
    $region11: #{tpu_custom_call.1} parent=1 // pred_check_branch
      %17 = sbr.rel (0) target = $region13
    $region12: #{tpu_custom_call.1} parent=1 // pred_region
      _
    $region13: #{tpu_custom_call.1} parent=1 // pred_fallthru
      _
    // Predicated region
    $region14: #{tpu_custom_call.1} parent=1 // pred_check
      _
    $region15: #{tpu_custom_call.1} parent=1 // pred_check_branch
      %19 = sbr.rel (0) target = $region17
    $region16: #{tpu_custom_call.1} parent=1 // pred_region
      _
    $region17: #{tpu_custom_call.1} parent=1 // pred_fallthru
      _
    // Predicated region
    $region18: #{tpu_custom_call.1} parent=1 // pred_check
      _
    $region19: #{tpu_custom_call.1} parent=1 // pred_check_branch
      %21 = sbr.rel (0) target = $region21
    $region20: #{tpu_custom_call.1} parent=1 // pred_region
      _
    $region21: #{tpu_custom_call.1} parent=1 // pred_fallthru
      _
    // Predicated region
    $region22: #{tpu_custom_call.1} parent=1 // pred_check
      _
    $region23: #{tpu_custom_call.1} parent=1 // pred_check_branch
      %23 = sbr.rel (0) target = $region25
    $region24: #{tpu_custom_call.1} parent=1 // pred_region
      _
    $region25: #{tpu_custom_call.1} parent=1 // pred_fallthru
      _
    %p24 = scmp.eq.s32.totalorder 0, 0
    // Predicated region
    $region26: #{tpu_custom_call.1} parent=1 // pred_check
      %p25 = pneg %p24
    $region27: #{tpu_custom_call.1} parent=1 // pred_check_branch
      %27 = sbr.rel (%p25) target = $region29
    $region28: #{tpu_custom_call.1} parent=1 // pred_region
      %28 = vst [vmem:[#allocation2] sm:$0x3] 0.0
      %29 = vst [vmem:[#allocation3] sm:$0x3] 0.0
    $region29: #{tpu_custom_call.1} parent=1 // pred_fallthru
      _
    %v30 = vld [vmem:[%s3] sm:$0x3]
    %s31 = smul.u32 0, 8
    %v32 = vlaneseq
    %v33 = vand.u32 %v32, 127
    %v34 = vstv %s31
    %v35 = vadd.s32 %v34, %v33
    %36 = vset.pattern.permute.xlu0 0
    %37 = vperm.xlu0 %36, %v30
    %v38 = vpop.permute.xlu0 %37
    %vm39 = vcmp.lt.s32.totalorder %v35, %v38
    %v40 = vld [vmem:[%s2] sm:$0x3]
    %v41 = vadd.f32 %v40, 0.073619634
    %v42 = vld [vmem:[%s0] sm:$0x3]
    %v43 = vld [vmem:[%s1] sm:$0x1]
    %v44 = vunpack.c.l.bf16 %v43
    %v45 = vmax.f32 %v42, 0.0
    %v46 = vmul.f32 %v42, %v44
    %v47 = vsub.f32 %v45, %v46
    %v48 = vand.u32 2147483647, %v42
    %v49 = vsub.f32 0.0, %v48
    %v50 = vmul.f32 %v49, 1.442695
    %v51 = vpow.pop %v50
    %v52 = vadd.f32 %v51, 1.0
    %v53 = vlog2.pop %v52
    %v54 = vmul.f32 %v53, 0.6931472
    %v55 = vmul.f32 -0.5, %v51
    %v56 = vadd.f32 %v55, 1.0
    %v57 = vmul.f32 %v56, %v51
    %v58 = vand.u32 2147483647, %v51
    %vm59 = vcmp.lt.f32.partialorder %v58, 0.0004427343
    %v60 = vsel %vm59, %v57, %v54
    %v61 = vadd.f32 %v47, %v60
    %v62 = vsel %vm39, %v41, 0.0
    %v63 = vsel %vm39, %v61, 0.0
    %vm64 = vcmp.eq.s32.totalorder %v33, 0
    %v65 = vld [vmem:[#allocation2] sm:$0x3]
    %vm66 = vcmask 58368
    %v67 = vsel %vm66, %v62, 0.0
    %68 = vadd.xlane.f32.xlu0 %v67
    %v69 = vpop.xlane.xlu0 %68
    %v70 = vsel %vm64, %v69, 0.0
    %v71 = vadd.f32 %v65, %v70
    %72 = vst [vmem:[#allocation2] sm:$0x3] %v71
    %v73 = vld [vmem:[#allocation3] sm:$0x3]
    %v74 = vsel %vm66, %v63, 0.0
    %75 = vadd.xlane.f32.xlu0 %v74
    %v76 = vpop.xlane.xlu0 %75
    %v77 = vsel %vm64, %v76, 0.0
    %v78 = vadd.f32 %v73, %v77
    %79 = vst [vmem:[#allocation3] sm:$0x3] %v78
    // Predicated region
    $region30: #{tpu_custom_call.1} parent=1 // pred_check
      %p80 = pneg %p24
    $region31: #{tpu_custom_call.1} parent=1 // pred_check_branch
      %82 = sbr.rel (%p80) target = $region33
    $region32: #{tpu_custom_call.1} parent=1 // pred_region
      %vm83 = vcmp.eq.s32.totalorder %v33, 1
      %v84 = vsel %vm83, 0.09202454, 0.073619634
      %vm85 = vcmp.eq.s32.totalorder %v33, 2
      %v86 = vsel %vm85, 0.10429448, %v84
      %vm87 = vcmp.eq.s32.totalorder %v33, 3
      %v88 = vsel %vm87, 0.10429448, %v86
      %vm89 = vcmp.eq.s32.totalorder %v33, 4
      %v90 = vsel %vm89, 0.18773006, %v88
      %vm91 = vcmp.eq.s32.totalorder %v33, 5
      %v92 = vsel %vm91, 0.06257669, %v90
      %vm93 = vcmp.eq.s32.totalorder %v33, 6
      %v94 = vsel %vm93, 0.06257669, %v92
      %vm95 = vcmp.eq.s32.totalorder %v33, 7
      %v96 = vsel %vm95, 0.23466258, %v94
      %vm97 = vcmp.eq.s32.totalorder %v33, 8
      %v98 = vsel %vm97, 0.07822086, %v96
      %v99 = vld [vmem:[%s4] sm:$0x3]
      %v100 = vld [vmem:[%s5] sm:$0x3]
      %v101 = vmax.f32 %v99, 0.0
      %v102 = vmul.f32 %v99, %v100
      %v103 = vsub.f32 %v101, %v102
      %v104 = vand.u32 2147483647, %v99
      %v105 = vsub.f32 0.0, %v104
      %v106 = vmul.f32 %v105, 1.442695
      %v107 = vpow.pop %v106
      %v108 = vadd.f32 %v107, 1.0
      %v109 = vlog2.pop %v108
      %v110 = vmul.f32 %v109, 0.6931472
      %v111 = vmul.f32 -0.5, %v107
      %v112 = vadd.f32 %v111, 1.0
      %v113 = vmul.f32 %v112, %v107
      %v114 = vand.u32 2147483647, %v107
      %vm115 = vcmp.lt.f32.partialorder %v114, 0.0004427343
      %v116 = vsel %vm115, %v113, %v110
      %v117 = vadd.f32 %v103, %v116
      %v118 = vmul.f32 %v117, %v98
      %vm119 = vcmask 66560
      %v120 = vsel %vm119, %v118, 0.0
      %121 = vadd.xlane.f32.xlu0 %v120
      %v122 = vpop.xlane.xlu0 %121
      %v123 = vrot.slane %v122, 4
      %v124 = vadd.f32 %v122, %v123
      %v125 = vrot.slane %v124, 2
      %v126 = vadd.f32 %v124, %v125
      %v127 = vrot.slane %v126, 1
      %v128 = vadd.f32 %v126, %v127
      %s129 = vtos %v128
      %v130 = vld [vmem:[#allocation2] sm:$0x3]
      %vm131 = vcmask 1041408
      %v132 = vsel %vm131, %v130, 0.0
      %133 = vadd.xlane.f32.xlu0 %v132
      %v134 = vpop.xlane.xlu0 %133
      %v135 = vld [vmem:[#allocation3] sm:$0x3]
      %v136 = vsel %vm131, %v135, 0.0
      %137 = vadd.xlane.f32.xlu0 %v136
      %v138 = vpop.xlane.xlu0 %137
      %v139 = vcvt.s32.f32 %v30
      %v140 = vmax.f32 %v139, 1.0
      %v141 = vrcp.pop %v140
      %v142 = vmul.f32 %v134, %v141
      %v143 = vmul.f32 %v142, 0.073619634
      %v144 = vmul.f32 %v143, %v138
      %vm145 = vcmask 1024
      %v146 = vsel %vm145, %v144, 0.0
      %147 = vadd.xlane.f32.xlu0 %v146
      %v148 = vpop.xlane.xlu0 %147
      %v149 = vrot.slane %v148, 4
      %v150 = vadd.f32 %v148, %v149
      %v151 = vrot.slane %v150, 2
      %v152 = vadd.f32 %v150, %v151
      %v153 = vrot.slane %v152, 1
      %v154 = vadd.f32 %v152, %v153
      %s155 = vtos %v154
      %v156 = vmul.f32 %v143, %v139
      %v157 = vsel %vm145, %v156, 0.0
      %158 = vadd.xlane.f32.xlu0 %v157
      %v159 = vpop.xlane.xlu0 %158
      %v160 = vrot.slane %v159, 4
      %v161 = vadd.f32 %v159, %v160
      %v162 = vrot.slane %v161, 2
      %v163 = vadd.f32 %v161, %v162
      %v164 = vrot.slane %v163, 1
      %v165 = vadd.f32 %v163, %v164
      %s166 = vtos %v165
      %s167 = sadd.f32 %s166, 2.0
      %v168 = vlaneseq
      %v169 = vshrl.u32 %v168, 7
      %s170 = sadd.f32 %s129, %s155
      %vm171 = vcmp.eq.s32.totalorder %v169, 0
      %vm172 = vmand %vm171, %vm64
      %vm173 = vmand %vm171, %vm83
      %v174 = vstv %s167
      %v175 = vsel %vm173, %v174, 0.0
      %v176 = vstv %s170
      %v177 = vsel %vm172, %v176, %v175
      %178 = vst [vmem:[#allocation4] sm:$0xff] %v177
    $region33: #{tpu_custom_call.1} parent=1 // pred_fallthru
      _
    // Predicated region
    $region34: #{tpu_custom_call.1} parent=1 // pred_check
      _
    $region35: #{tpu_custom_call.1} parent=1 // pred_check_branch
      %180 = sbr.rel (0) target = $region37
    $region36: #{tpu_custom_call.1} parent=1 // pred_region
      %s182 = ssub.s32 128, 128
      %183 = vsyncadd [#allocation5], %s182
      %s185 = sshll.u32 [#allocation4], 4
      %s186 = int_to_ptr.vmem [resolvable:$true] %s185
      %188 = dma.vmem_to_hbm [thread:$0]  %s186, 128, %s6, [#allocation5]
    $region37: #{tpu_custom_call.1} parent=1 // pred_fallthru
      _
    // Predicated region
    $region38: #{tpu_custom_call.1} parent=1 // pred_check
      _
    $region39: #{tpu_custom_call.1} parent=1 // pred_check_branch
      %190 = sbr.rel (0) target = $region41
    $region40: #{tpu_custom_call.1} parent=1 // pred_region
      %191 = dma.done [#allocation5], 128
    $region41: #{tpu_custom_call.1} parent=1 // pred_fallthru
      _
    %192 = vsyncpa [#allocation5], 1

</llo_original>
